<compile_context>
chip_gen: v6e
topology: v6e:2x2x1
jax: 0.10.0
libtpu: 0.0.40
codegen_flags: <defaults>
</compile_context>

<pallas_src>
import functools

import jax
import jax.numpy as jnp
from jax.experimental import pallas as pl
from jax.experimental.pallas import tpu as pltpu

_SMOOTH = 0.0001
_LANES = 128


def _sublane_mult(dtype) -> int:
    # Sub-32-bit dtypes pack along sublanes: 8 rows for f32, 16 for bf16, 32 for int8.
    return max(8, 32 // jnp.dtype(dtype).itemsize)


def _round_up(x: int, m: int) -> int:
    return ((x + m - 1) // m) * m


def _chip_defaults():
    """Return (num_tensorcores, target_tile_rows) for the attached TPU generation."""
    try:
        kind = jax.devices()[0].device_kind.lower()
    except Exception:
        kind = ""
    if "v7" in kind or "tpu7" in kind.replace(" ", ""):
        # 2 TCs/chip, ~3.2 TB/s HBM, 64 MiB VMEM: 2-way split + 4 MiB f32 blocks.
        return 2, 8192
    # v5e / v6e: single TensorCore, 2 MiB f32 blocks (8 MiB double-buffered total,
    # under the 16 MiB scoped-VMEM default on v5e).
    return 1, 4096


def _dice_partial_kernel(yt_ref, yp_ref, inter_ref, union_ref, *,
                         rows, tile_rows, tiles_per_split, need_mask):
    c = pl.program_id(0)   # split index ("parallel" -> megacore sharding on v7x)
    k = pl.program_id(1)   # tile index within split (sequential reduction axis)

    # Zero the resident vector accumulators at the start of each split's sweep.
    @pl.when(k == 0)
    def _init():
        inter_ref[...] = jnp.zeros_like(inter_ref)
        union_ref[...] = jnp.zeros_like(union_ref)

    yt = yt_ref[...].astype(jnp.float32)
    yp = yp_ref[...].astype(jnp.float32)
    g = tile_rows // 8

    def _accumulate(yt_t, yp_t):
        # Collapse the tile onto one (8,128) vreg per quantity with elementwise
        # adds only (the (tile_rows,128)->(g,8,128) reshape is (8,128)-aligned,
        # so no relayout).  Final cross-lane reduce happens in the wrapper.
        prod = (yt_t * yp_t).reshape(g, 8, _LANES)
        both = (yt_t + yp_t).reshape(g, 8, _LANES)      # fused union reduction
        inter_ref[...] += jnp.sum(prod, axis=0, keepdims=True)
        union_ref[...] += jnp.sum(both, axis=0, keepdims=True)

    if not need_mask:
        _accumulate(yt, yp)
    else:
        # Only edge tiles (partial last tile / over-coverage tile on an odd
        # split) pay for the iota + compare + selects; interior tiles take the
        # unmasked fast path so the hot loop stays pure mul+add.
        row_start = (c * tiles_per_split + k) * tile_rows
        is_edge = row_start + tile_rows > rows

        @pl.when(jnp.logical_not(is_edge))
        def _fast():
            _accumulate(yt, yp)

        @pl.when(is_edge)
        def _masked():
            local_row = jax.lax.broadcasted_iota(
                jnp.int32, (tile_rows, _LANES), 0)
            valid = (row_start + local_row) < rows
            _accumulate(jnp.where(valid, yt, 0.0), jnp.where(valid, yp, 0.0))


def dice_loss(y_true: jax.Array, y_pred: jax.Array, *,
              target_tile_rows: int | None = None) -> jax.Array:
    assert y_true.shape == y_pred.shape, "shapes must match"

    num_splits_hw, target_default = _chip_defaults()
    target = target_default if target_tile_rows is None else target_tile_rows

    # Flatten in native dtypes (no promotion copy); reshape(-1) of a contiguous
    # array is a bitcast, not an HBM copy.
    yt = y_true.reshape(-1)
    yp = y_pred.reshape(-1)
    n = yt.size
    assert n > 0

    # Lane-dense 2-D view.  When n % 128 == 0 (typical NCHW numel) this is a
    # pure bitcast.  Otherwise pad only to the next lane multiple (<128 extra
    # zeros; the single case where a wrapper copy is unavoidable).
    if n % _LANES != 0:
        pad = _LANES - n % _LANES
        yt = jnp.pad(yt, (0, pad))
        yp = jnp.pad(yp, (0, pad))
    rows = yt.size // _LANES
    yt2 = yt.reshape(rows, _LANES)
    yp2 = yp.reshape(rows, _LANES)

    sub_mult = max(_sublane_mult(yt2.dtype), _sublane_mult(yp2.dtype))
    tile_rows = min(_round_up(target, sub_mult), _round_up(rows, sub_mult))
    total_tiles = pl.cdiv(rows, tile_rows)

    # 2-way core split only when the chip has 2 TensorCores AND the grid is
    # long enough for it to pay off; otherwise keep the unsplit fast path.
    num_splits = num_splits_hw if total_tiles >= 2 * num_splits_hw else 1
    tiles_per_split = pl.cdiv(total_tiles, num_splits)
    over_coverage = num_splits * tiles_per_split != total_tiles
    need_mask = (rows % tile_rows != 0) or (rows < tile_rows) or over_coverage

    def in_block(c, k):
        idx = c * tiles_per_split + k
        if over_coverage:
            # Keep the DMA in bounds; the kernel fully masks the duplicate tile.
            idx = jnp.minimum(idx, total_tiles - 1)
        return (idx, 0)

    kernel = functools.partial(
        _dice_partial_kernel,
        rows=rows,
        tile_rows=tile_rows,
        tiles_per_split=tiles_per_split,
        need_mask=need_mask,
    )

    bytes_in = (n * jnp.dtype(yt2.dtype).itemsize
                + n * jnp.dtype(yp2.dtype).itemsize)

    inter_p, union_p = pl.pallas_call(
        kernel,
        out_shape=(
            jax.ShapeDtypeStruct((num_splits, 8, _LANES), jnp.float32),
            jax.ShapeDtypeStruct((num_splits, 8, _LANES), jnp.float32),
        ),
        grid_spec=pltpu.PrefetchScalarGridSpec(
            num_scalar_prefetch=0,
            grid=(num_splits, tiles_per_split),
            in_specs=[
                pl.BlockSpec((tile_rows, _LANES), in_block),
                pl.BlockSpec((tile_rows, _LANES), in_block),
            ],
            out_specs=[
                pl.BlockSpec((1, 8, _LANES), lambda c, k: (c, 0, 0)),
                pl.BlockSpec((1, 8, _LANES), lambda c, k: (c, 0, 0)),
            ],
        ),
        compiler_params=pltpu.CompilerParams(
            dimension_semantics=("parallel", "arbitrary"),
        ),
        cost_estimate=pl.CostEstimate(
            flops=3 * n,
            transcendentals=0,
            bytes_accessed=bytes_in + 2 * num_splits * 8 * _LANES * 4,
        ),
    )(yt2, yp2)

    # Tiny epilogue: combine per-core vector partials and form the loss.
    intersection = jnp.sum(inter_p)
    union_sum = jnp.sum(union_p)
    dice = 2.0 * intersection / (union_sum + jnp.float32(_SMOOTH))
    return (1.0 - dice).astype(jnp.float32)


def _dice_loss_ref(y_true, y_pred):
    yt = y_true.astype(jnp.float32)
    yp = y_pred.astype(jnp.float32)
    inter = jnp.sum(yt * yp)
    union = jnp.sum(yt) + jnp.sum(yp)
    return 1.0 - 2.0 * inter / (union + _SMOOTH)


if __name__ == "__main__":
    key = jax.random.PRNGKey(0)
    k1, k2, k3, k4 = jax.random.split(key, 4)

    # Primary small NCHW case: batch=2, channels=4, spatial=16x16 (aligned,
    # single-tile, unmasked fast path).
    shape = (2, 4, 16, 16)
    y_true = (jax.random.uniform(k1, shape) > 0.5).astype(jnp.float32)  # mask
    y_pred = jax.random.uniform(k2, shape, dtype=jnp.float32)           # soft preds
    loss = jax.block_until_ready(dice_loss(y_true, y_pred))
    ref = jax.block_until_ready(_dice_loss_ref(y_true, y_pred))
    assert jnp.allclose(loss, ref, rtol=1e-5, atol=1e-5), (loss, ref)

    # Non-tile-aligned case (numel % 128 == 0 but rows % 8 != 0): exercises the
    # zero-copy bitcast path plus the gated edge-tile mask.
    shape2 = (2, 4, 180, 200)
    y_true2 = (jax.random.uniform(k3, shape2) > 0.5).astype(jnp.float32)
    y_pred2 = jax.random.uniform(k4, shape2, dtype=jnp.float32)
    loss2 = jax.block_until_ready(dice_loss(y_true2, y_pred2))
    ref2 = jax.block_until_ready(_dice_loss_ref(y_true2, y_pred2))
    assert jnp.allclose(loss2, ref2, rtol=1e-4, atol=1e-5), (loss2, ref2)

    # Same data with a small forced tile to exercise multi-tile streaming with
    # interior fast-path tiles plus one masked partial edge tile.
    loss3 = jax.block_until_ready(
        dice_loss(y_true2, y_pred2, target_tile_rows=256))
    assert jnp.allclose(loss3, ref2, rtol=1e-4, atol=1e-5), (loss3, ref2)

    print("KERNEL_OK")
</pallas_src>

<mosaic_0001>
module attributes {stable_mosaic.version = 11 : i64} {
  func.func @_dice_partial_kernel(%arg0: i32, %arg1: i32, %arg2: memref<16x128xf32, #tpu.memory_space<vmem>>, %arg3: memref<16x128xf32, #tpu.memory_space<vmem>>, %arg4: memref<1x8x128xf32, #tpu.memory_space<vmem>>, %arg5: memref<1x8x128xf32, #tpu.memory_space<vmem>>) attributes {dimension_semantics = [#tpu.dimension_semantics<parallel>, #tpu.dimension_semantics<arbitrary>], iteration_bounds = array<i64: 1, 1>, scalar_prefetch = 0 : i64, scratch_operands = 0 : i64, tpu.core_type = #tpu.core_type<tc>, window_params = [{transform_indices = @transform_0, window_bounds = array<i64: 16, 128>}, {transform_indices = @transform_1, window_bounds = array<i64: 16, 128>}, {transform_indices = @transform_2, window_bounds = array<i64: 1, 8, 128>}, {transform_indices = @transform_3, window_bounds = array<i64: 1, 8, 128>}]} {
    %c0_i32 = arith.constant 0 : i32
    %0 = arith.cmpi eq, %arg1, %c0_i32 : i32
    %1 = arith.extui %0 : i1 to i32
    %c0_i32_0 = arith.constant 0 : i32
    %2 = arith.cmpi ne, %1, %c0_i32_0 : i32
    scf.if %2 {
      %cst_17 = arith.constant 0.000000e+00 : f32
      %19 = vector.broadcast %cst_17 : f32 to vector<1x8x128xf32>
      %c0_18 = arith.constant 0 : index
      %c0_19 = arith.constant 0 : index
      %c0_20 = arith.constant 0 : index
      %20 = vector.load %arg4[%c0_18, %c0_19, %c0_20] : memref<1x8x128xf32, #tpu.memory_space<vmem>>, vector<1x8x128xf32>
      tpu.vector_store %arg4[%c0_18, %c0_19, %c0_20], %19 {strides = array<i32>} : memref<1x8x128xf32, #tpu.memory_space<vmem>>, vector<1x8x128xf32>,
      %cst_21 = arith.constant 0.000000e+00 : f32
      %21 = vector.broadcast %cst_21 : f32 to vector<1x8x128xf32>
      %c0_22 = arith.constant 0 : index
      %c0_23 = arith.constant 0 : index
      %c0_24 = arith.constant 0 : index
      %22 = vector.load %arg5[%c0_22, %c0_23, %c0_24] : memref<1x8x128xf32, #tpu.memory_space<vmem>>, vector<1x8x128xf32>
      tpu.vector_store %arg5[%c0_22, %c0_23, %c0_24], %21 {strides = array<i32>} : memref<1x8x128xf32, #tpu.memory_space<vmem>>, vector<1x8x128xf32>,
    } else {
    }
    %c0 = arith.constant 0 : index
    %c0_1 = arith.constant 0 : index
    %3 = vector.load %arg2[%c0, %c0_1] : memref<16x128xf32, #tpu.memory_space<vmem>>, vector<16x128xf32>
    %c0_2 = arith.constant 0 : index
    %c0_3 = arith.constant 0 : index
    %4 = vector.load %arg3[%c0_2, %c0_3] : memref<16x128xf32, #tpu.memory_space<vmem>>, vector<16x128xf32>
    %5 = arith.mulf %3, %4 : vector<16x128xf32>
    %6 = vector.shape_cast %5 : vector<16x128xf32> to vector<2x8x128xf32>
    %7 = arith.addf %3, %4 : vector<16x128xf32>
    %8 = vector.shape_cast %7 : vector<16x128xf32> to vector<2x8x128xf32>
    %c0_4 = arith.constant 0 : index
    %c0_5 = arith.constant 0 : index
    %c0_6 = arith.constant 0 : index
    %9 = vector.load %arg4[%c0_4, %c0_5, %c0_6] : memref<1x8x128xf32, #tpu.memory_space<vmem>>, vector<1x8x128xf32>
    %cst = arith.constant dense<0.000000e+00> : vector<8x128xf32>
    %10 = vector.multi_reduction <add>, %6, %cst [0] : vector<2x8x128xf32> to vector<8x128xf32>
    %11 = vector.shape_cast %10 : vector<8x128xf32> to vector<1x8x128xf32>
    %12 = arith.addf %9, %11 : vector<1x8x128xf32>
    %c0_7 = arith.constant 0 : index
    %c0_8 = arith.constant 0 : index
    %c0_9 = arith.constant 0 : index
    %13 = vector.load %arg4[%c0_7, %c0_8, %c0_9] : memref<1x8x128xf32, #tpu.memory_space<vmem>>, vector<1x8x128xf32>
    tpu.vector_store %arg4[%c0_7, %c0_8, %c0_9], %12 {strides = array<i32>} : memref<1x8x128xf32, #tpu.memory_space<vmem>>, vector<1x8x128xf32>,
    %c0_10 = arith.constant 0 : index
    %c0_11 = arith.constant 0 : index
    %c0_12 = arith.constant 0 : index
    %14 = vector.load %arg5[%c0_10, %c0_11, %c0_12] : memref<1x8x128xf32, #tpu.memory_space<vmem>>, vector<1x8x128xf32>
    %cst_13 = arith.constant dense<0.000000e+00> : vector<8x128xf32>
    %15 = vector.multi_reduction <add>, %8, %cst_13 [0] : vector<2x8x128xf32> to vector<8x128xf32>
    %16 = vector.shape_cast %15 : vector<8x128xf32> to vector<1x8x128xf32>
    %17 = arith.addf %14, %16 : vector<1x8x128xf32>
    %c0_14 = arith.constant 0 : index
    %c0_15 = arith.constant 0 : index
    %c0_16 = arith.constant 0 : index
    %18 = vector.load %arg5[%c0_14, %c0_15, %c0_16] : memref<1x8x128xf32, #tpu.memory_space<vmem>>, vector<1x8x128xf32>
    tpu.vector_store %arg5[%c0_14, %c0_15, %c0_16], %17 {strides = array<i32>} : memref<1x8x128xf32, #tpu.memory_space<vmem>>, vector<1x8x128xf32>,
    return
  }
  func.func @transform_0(%arg0: i32, %arg1: i32) -> (i32, i32) {
    %c1_i32 = arith.constant 1 : i32
    %0 = arith.muli %arg0, %c1_i32 : i32
    %1 = arith.addi %0, %arg1 : i32
    %c0_i32 = arith.constant 0 : i32
    %c0_i32_0 = arith.constant 0 : i32
    return %1, %c0_i32 : i32, i32
  }
  func.func @transform_1(%arg0: i32, %arg1: i32) -> (i32, i32) {
    %c1_i32 = arith.constant 1 : i32
    %0 = arith.muli %arg0, %c1_i32 : i32
    %1 = arith.addi %0, %arg1 : i32
    %c0_i32 = arith.constant 0 : i32
    %c0_i32_0 = arith.constant 0 : i32
    return %1, %c0_i32 : i32, i32
  }
  func.func @transform_2(%arg0: i32, %arg1: i32) -> (i32, i32, i32) {
    %c0_i32 = arith.constant 0 : i32
    %c0_i32_0 = arith.constant 0 : i32
    %c0_i32_1 = arith.constant 0 : i32
    return %arg0, %c0_i32, %c0_i32_0 : i32, i32, i32
  }
  func.func @transform_3(%arg0: i32, %arg1: i32) -> (i32, i32, i32) {
    %c0_i32 = arith.constant 0 : i32
    %c0_i32_0 = arith.constant 0 : i32
    %c0_i32_1 = arith.constant 0 : i32
    return %arg0, %c0_i32, %c0_i32_0 : i32, i32, i32
  }
}

</mosaic_0001>

<llo_original>
// kernel: tpu_custom_call.1
$region0: #{tpu_custom_call.1}
  #allocation0 [shape = 'u32[]', space=smem, size = 0x4, offset = 0x4, fixed_abs, tag = 'smem constant byte address 0x4 - core index']
  #allocation1 [shape = 'u32[144,128]{1,0:T(1,128)}', space=vmem, size = 0x12000, scoped, tag = 'internal scratch']
  %s0 = inlined_call_operand.hbm [shape: f32[16,128], index: 0, kind: input, shape index: {}]
  %s1 = inlined_call_operand.hbm [shape: f32[16,128], index: 1, kind: input, shape index: {}]
  %s2 = inlined_call_operand.hbm [shape: f32[1,8,128], index: 2, kind: output, shape index: {0}]
  %s3 = inlined_call_operand.hbm [shape: f32[1,8,128], index: 3, kind: output, shape index: {1}]
  %4 = xla_tuple %s2, %s3
  %s5 = sld [smem:[#allocation0]]
  $region38: #{tpu_custom_call.1} parent=0
    _
  %s7 = ssub.s32 1, %s5
  %s8 = scalar_select 0, %s7, %s5
  $region1: #{tpu_custom_call.1} parent=0
    #allocation2 [shape = 'u8[8192]{0}', space=vmem, size = 0x2000, scoped, tag = 'input window, operand 0, single buffered']
    #allocation3 [shape = 's32[1]{0}', space=sflag, size = 0x4, scoped, tag = 'scoped memory for tpu_custom_call.1']
    #allocation4 [shape = 's32[1]{0}', space=sflag, size = 0x4, scoped, tag = 'scoped memory for tpu_custom_call.1']
    #allocation5 [shape = 'u8[8192]{0}', space=vmem, size = 0x2000, scoped, tag = 'input window, operand 1, single buffered']
    #allocation6 [shape = 's32[1]{0}', space=sflag, size = 0x4, scoped, tag = 'scoped memory for tpu_custom_call.1']
    #allocation7 [shape = 'u8[4096]{0}', space=vmem, size = 0x1000, scoped, tag = 'output window, operand 0, single buffered']
    #allocation8 [shape = 'u8[4096]{0}', space=vmem, size = 0x1000, scoped, tag = 'output window, operand 1, single buffered']
    #allocation9 [shape = 's32[1]{0}', space=sflag, size = 0x4, scoped, tag = 'scoped memory for tpu_custom_call.1']
    %9 = vsyncpa [#allocation3], 0
    %10 = vsyncpa [#allocation6], 0
    %11 = vsyncpa [#allocation4], 0
    %12 = vsyncpa [#allocation9], 0
    // Predicated region
    $region2: #{tpu_custom_call.1} parent=1 // pred_check
      _
    $region3: #{tpu_custom_call.1} parent=1 // pred_check_branch
      %14 = sbr.rel (0) target = $region5
    $region4: #{tpu_custom_call.1} parent=1 // pred_region
      %s15 = sadd.s32 0, 0
      %s16 = smul.u32 2, %s15
      %s18 = ssub.s32 256, 256
      %19 = vsyncadd [#allocation3], %s18
      %s20 = smul.addr %s16, 128
      %s21 = scalar_lea.hbm %s0, %s20
      %s22 = sshll.u32 [#allocation2], 4
      %s23 = int_to_ptr.vmem [resolvable:$true] %s22
      %28 = dma.hbm_to_vmem [thread:$0]  %s21, 256, %s23, [#allocation3], 128, 128, 8
    $region5: #{tpu_custom_call.1} parent=1 // pred_fallthru
      _
    // Predicated region
    $region6: #{tpu_custom_call.1} parent=1 // pred_check
      _
    $region7: #{tpu_custom_call.1} parent=1 // pred_check_branch
      %30 = sbr.rel (0) target = $region9
    $region8: #{tpu_custom_call.1} parent=1 // pred_region
      %s31 = sadd.s32 0, 0
      %s32 = smul.u32 2, %s31
      %s34 = ssub.s32 256, 256
      %35 = vsyncadd [#allocation6], %s34
      %s36 = smul.addr %s32, 128
      %s37 = scalar_lea.hbm %s1, %s36
      %s38 = sshll.u32 [#allocation5], 4
      %s39 = int_to_ptr.vmem [resolvable:$true] %s38
      %44 = dma.hbm_to_vmem [thread:$0]  %s37, 256, %s39, [#allocation6], 128, 128, 8
    $region9: #{tpu_custom_call.1} parent=1 // pred_fallthru
      _
    // Predicated region
    $region10: #{tpu_custom_call.1} parent=1 // pred_check
      _
    $region11: #{tpu_custom_call.1} parent=1 // pred_check_branch
      %46 = sbr.rel (0) target = $region13
    $region12: #{tpu_custom_call.1} parent=1 // pred_region
      %47 = dma.done [#allocation3], 256
    $region13: #{tpu_custom_call.1} parent=1 // pred_fallthru
      _
    // Predicated region
    $region14: #{tpu_custom_call.1} parent=1 // pred_check
      _
    $region15: #{tpu_custom_call.1} parent=1 // pred_check_branch
      %49 = sbr.rel (0) target = $region17
    $region16: #{tpu_custom_call.1} parent=1 // pred_region
      %50 = dma.done [#allocation6], 256
    $region17: #{tpu_custom_call.1} parent=1 // pred_fallthru
      _
    %s51 = sadd.s32 0, 0
    %s52 = smul.u32 2, %s51
    %s53 = sadd.s32 0, 0
    %s54 = smul.u32 2, %s53
    %p55 = scmp.eq.s32.totalorder 0, 0
    // Predicated region
    $region18: #{tpu_custom_call.1} parent=1 // pred_check
      %p56 = pneg %p55
    $region19: #{tpu_custom_call.1} parent=1 // pred_check_branch
      %58 = sbr.rel (%p56) target = $region21
    $region20: #{tpu_custom_call.1} parent=1 // pred_region
      %59 = vst [vmem:[#allocation7] sm:$0xff] 0.0
      %60 = vst [vmem:[#allocation8] sm:$0xff] 0.0
    $region21: #{tpu_custom_call.1} parent=1 // pred_fallthru
      _
    %v61 = vld [vmem:[#allocation2] sm:$0xff]
    %v62 = vld [vmem:[#allocation2 + $0x8] sm:$0xff]
    %v63 = vld [vmem:[#allocation5] sm:$0xff]
    %v64 = vld [vmem:[#allocation5 + $0x8] sm:$0xff]
    %v65 = vmul.f32 %v61, %v63
    %v66 = vmul.f32 %v62, %v64
    %v67 = vadd.f32 %v61, %v63
    %v68 = vadd.f32 %v62, %v64
    %v69 = vld [vmem:[#allocation7] sm:$0xff]
    %v70 = vadd.f32 %v65, %v66
    %v71 = vadd.f32 %v69, %v70
    %72 = vst [vmem:[#allocation7] sm:$0xff] %v71
    %v73 = vld [vmem:[#allocation8] sm:$0xff]
    %v74 = vadd.f32 %v67, %v68
    %v75 = vadd.f32 %v73, %v74
    %76 = vst [vmem:[#allocation8] sm:$0xff] %v75
    // Predicated region
    $region22: #{tpu_custom_call.1} parent=1 // pred_check
      _
    $region23: #{tpu_custom_call.1} parent=1 // pred_check_branch
      %78 = sbr.rel (0) target = $region25
    $region24: #{tpu_custom_call.1} parent=1 // pred_region
      %s80 = ssub.s32 128, 128
      %81 = vsyncadd [#allocation4], %s80
      %s83 = sshll.u32 [#allocation7], 4
      %s84 = int_to_ptr.vmem [resolvable:$true] %s83
      %86 = dma.vmem_to_hbm [thread:$0]  %s84, 128, %s2, [#allocation4]
    $region25: #{tpu_custom_call.1} parent=1 // pred_fallthru
      _
    // Predicated region
    $region26: #{tpu_custom_call.1} parent=1 // pred_check
      _
    $region27: #{tpu_custom_call.1} parent=1 // pred_check_branch
      %88 = sbr.rel (0) target = $region29
    $region28: #{tpu_custom_call.1} parent=1 // pred_region
      %s90 = ssub.s32 128, 128
      %91 = vsyncadd [#allocation9], %s90
      %s93 = sshll.u32 [#allocation8], 4
      %s94 = int_to_ptr.vmem [resolvable:$true] %s93
      %96 = dma.vmem_to_hbm [thread:$0]  %s94, 128, %s3, [#allocation9]
    $region29: #{tpu_custom_call.1} parent=1 // pred_fallthru
      _
    // Predicated region
    $region30: #{tpu_custom_call.1} parent=1 // pred_check
      _
    $region31: #{tpu_custom_call.1} parent=1 // pred_check_branch
      %98 = sbr.rel (0) target = $region33
    $region32: #{tpu_custom_call.1} parent=1 // pred_region
      %99 = dma.done [#allocation4], 128
    $region33: #{tpu_custom_call.1} parent=1 // pred_fallthru
      _
    // Predicated region
    $region34: #{tpu_custom_call.1} parent=1 // pred_check
      _
    $region35: #{tpu_custom_call.1} parent=1 // pred_check_branch
      %101 = sbr.rel (0) target = $region37
    $region36: #{tpu_custom_call.1} parent=1 // pred_region
      %102 = dma.done [#allocation9], 128
    $region37: #{tpu_custom_call.1} parent=1 // pred_fallthru
      _
    %103 = vsyncpa [#allocation3], 1
    %104 = vsyncpa [#allocation6], 1
    %105 = vsyncpa [#allocation4], 1
    %106 = vsyncpa [#allocation9], 1

</llo_original>
